<compile_context>
chip_gen: v7x
topology: tpu7x:2x2x1
jax: 0.10.0
libtpu: 0.0.40
codegen_flags: <defaults>
</compile_context>

<pallas_src>
import functools

import numpy as np
import jax
import jax.numpy as jnp
from jax.experimental import pallas as pl
from jax.experimental.pallas import tpu as pltpu


TR_MAX = 24          # max anchor-tile rows per grid step (24*128 = 3072 anchors)


# ---------------------------------------------------------------------------
# Pallas kernel: per-image / per-anchor-tile partial losses.
#   out_ref: (1, 6+C, TR, 128)  decoded predictions, channel-first, lane-dense
#   msk_ref: (1, 2,   TR, 128)  resized [background, target] masks
#   asg_ref: (1, 8,   TR, 128)  [fg, gt_cx, gt_cy, gt_w, gt_h, gt_iou, gt_cls, has_gt]
#   res_ref: (1, 8, 128)        128-lane partial sums, accumulated over anchor
#                               tiles: [reg, mask, iou, cls, num_m, num_fg, 0, 0]
# ---------------------------------------------------------------------------
def _loss_kernel(out_ref, msk_ref, asg_ref, res_ref):
    t = pl.program_id(1)

    @pl.when(t == 0)
    def _():
        res_ref[...] = jnp.zeros_like(res_ref)

    # assignment channels (each a dense (TR, 128) tile)
    fg = asg_ref[0, 0]
    gt_cx = asg_ref[0, 1]
    gt_cy = asg_ref[0, 2]
    gt_w = asg_ref[0, 3]
    gt_h = asg_ref[0, 4]
    gt_iou = asg_ref[0, 5]
    gt_cls = asg_ref[0, 6]
    has_gt = asg_ref[0, 7]

    # prediction channels
    p_cx = out_ref[0, 0]
    p_cy = out_ref[0, 1]
    p_w = out_ref[0, 2]
    p_h = out_ref[0, 3]

    # --- IoU regression loss (GetIouLoss, YOLOX-style: 1 - iou^2), cxcywh ---
    tl_x = jnp.maximum(p_cx - 0.5 * p_w, gt_cx - 0.5 * gt_w)
    tl_y = jnp.maximum(p_cy - 0.5 * p_h, gt_cy - 0.5 * gt_h)
    br_x = jnp.minimum(p_cx + 0.5 * p_w, gt_cx + 0.5 * gt_w)
    br_y = jnp.minimum(p_cy + 0.5 * p_h, gt_cy + 0.5 * gt_h)
    inter = jnp.maximum(br_x - tl_x, 0.0) * jnp.maximum(br_y - tl_y, 0.0)
    union = p_w * p_h + gt_w * gt_h - inter + 1e-16
    iou = inter / union
    reg_term = (1.0 - iou * iou) * fg                             # (TR, 128)

    # --- numerically-stable BCE-with-logits (matches nn.BCEWithLogitsLoss) ---
    def bce(x, tgt):
        return jnp.maximum(x, 0.0) - x * tgt + jnp.log1p(jnp.exp(-jnp.abs(x)))

    # mask loss (anchors with any nonzero mask; only images that have GTs)
    bm = msk_ref[0, 0]
    tm = msk_ref[0, 1]
    idx_mask = ((bm + tm) > 0.0).astype(jnp.float32) * has_gt
    mask_term = bce(out_ref[0, 4], tm) * idx_mask

    # objectness / iou-quality loss on foreground anchors
    iou_term = bce(out_ref[0, 5], gt_iou) * fg

    # classification loss over all anchors; one-hot target only on fg anchors.
    # Static Python loop over C keeps per-channel loads to single vreg tiles.
    num_cls = out_ref.shape[1] - 6
    cls_sum = jnp.zeros_like(fg)
    for c in range(num_cls):
        tgt_c = fg * (gt_cls == float(c)).astype(jnp.float32)
        cls_sum = cls_sum + bce(out_ref[0, 6 + c], tgt_c)
    cls_term = cls_sum * has_gt

    # --- accumulate 128-lane partials (sublane-axis reduction only) ---------
    def acc(row, term):
        cur = res_ref[0, row:row + 1, :]
        res_ref[0, row:row + 1, :] = cur + jnp.sum(term, axis=0, keepdims=True)

    acc(0, reg_term)
    acc(1, mask_term)
    acc(2, iou_term)
    acc(3, cls_term)
    acc(4, idx_mask)   # num_m
    acc(5, fg)         # num_fg


# ---------------------------------------------------------------------------
# Glue: nearest-neighbour mask resize, built channel-first (no transpose).
# PyTorch transforms.Resize(NEAREST): src_idx = floor(dst_idx * in / out).
# ---------------------------------------------------------------------------
def resize_masks_cf(masks, sizes):
    # masks: (B, W, H, 2) -> (B, 2, sum(s*s))
    B, W, H, _ = masks.shape
    chans = []
    for c in range(2):
        mc = masks[..., c]
        pieces = []
        for s in sizes:
            i0 = (jnp.arange(s) * W) // s
            i1 = (jnp.arange(s) * H) // s
            pieces.append(mc[:, i0[:, None], i1[None, :]].reshape(B, -1))
        chans.append(jnp.concatenate(pieces, axis=-1))
    return jnp.stack(chans, axis=1)


# ---------------------------------------------------------------------------
# Glue: simplified simOTA (fixed-shape).
# TODO(synk): simOTA dynamic-k cost matching has no clean fixed-shape Pallas
# equivalent; replaced with center-in-box + best-IoU assignment in plain JAX.
# ---------------------------------------------------------------------------
def _pairwise_iou_cxcywh(a, b):
    a_tl = a[:, None, :2] - 0.5 * a[:, None, 2:]
    a_br = a[:, None, :2] + 0.5 * a[:, None, 2:]
    b_tl = b[None, :, :2] - 0.5 * b[None, :, 2:]
    b_br = b[None, :, :2] + 0.5 * b[None, :, 2:]
    wh = jnp.maximum(jnp.minimum(a_br, b_br) - jnp.maximum(a_tl, b_tl), 0.0)
    inter = wh[..., 0] * wh[..., 1]
    area_a = a[:, None, 2] * a[:, None, 3]
    area_b = b[None, :, 2] * b[None, :, 3]
    return inter / (area_a + area_b - inter + 1e-16)


def simple_assignment_cf(output, target, grids, strides):
    # output: (A, 6+C), target: (G, 5) = [class, cx, cy, w, h] (class>0 valid)
    # returns channel-first (8, A) assignment + num_gt.
    A = output.shape[0]
    valid = target[:, 0] > 0
    gt_box = target[:, 1:5]
    centers = (grids + 0.5) * strides                      # (A, 2)

    dl = centers[:, None, 0] - (gt_box[None, :, 0] - 0.5 * gt_box[None, :, 2])
    dr = (gt_box[None, :, 0] + 0.5 * gt_box[None, :, 2]) - centers[:, None, 0]
    dt = centers[:, None, 1] - (gt_box[None, :, 1] - 0.5 * gt_box[None, :, 3])
    db = (gt_box[None, :, 1] + 0.5 * gt_box[None, :, 3]) - centers[:, None, 1]
    in_box = (jnp.minimum(jnp.minimum(dl, dr), jnp.minimum(dt, db)) > 0)
    in_box = in_box & valid[None, :]

    ious = _pairwise_iou_cxcywh(output[:, :4], gt_box)     # (A, G)
    score = jnp.where(in_box, ious, -1.0)
    matched = jnp.argmax(score, axis=1)                    # (A,)
    fg = jnp.any(in_box, axis=1).astype(jnp.float32)
    pred_iou = jnp.take_along_axis(ious, matched[:, None], axis=1)[:, 0]

    num_gt = jnp.sum(valid.astype(jnp.int32))
    has_gt = (num_gt > 0).astype(jnp.float32)

    m_box = gt_box[matched]                                # (A, 4)
    m_cls = target[matched, 0] - 1.0                       # (A,)
    assign = jnp.stack(
        [fg, m_box[:, 0], m_box[:, 1], m_box[:, 2], m_box[:, 3],
         pred_iou * fg, m_cls, has_gt * jnp.ones((A,), jnp.float32)], axis=0)
    return assign.astype(jnp.float32), num_gt


# ---------------------------------------------------------------------------
# Wrapper: full MyNetLoss.forward
# ---------------------------------------------------------------------------
@functools.partial(jax.jit, static_argnames=('sizes',))
def mynet_loss(targets, strides, grids, outputs, regs, masks, use_augs,
               sizes=(80, 40, 20)):
    del regs, use_augs  # unused by the reference forward body
    B, A, CH = outputs.shape

    # anchor padding: rows of 128 lanes, tile rows adapt to the problem size
    rows = -(-A // 128)
    if rows <= TR_MAX:
        TR = -(-rows // 8) * 8         # single tile, rounded up to a sublane mult.
    else:
        TR = TR_MAX
    R = -(-rows // TR) * TR
    A_pad = R * 128
    T = R // TR
    pad = A_pad - A

    # channel-first inputs built without standalone transposes where possible
    masks_cf = resize_masks_cf(masks.astype(jnp.float32), sizes)        # (B, 2, A)
    assign_cf, num_gt = jax.vmap(
        simple_assignment_cf, in_axes=(0, 0, None, None))(
            outputs.astype(jnp.float32), targets.astype(jnp.float32),
            grids, strides)                                             # (B, 8, A)

    # single fused relayout for predictions; zero-pad so padded anchors carry
    # fg = has_gt = masks = 0 and contribute nothing to the sums
    out_cf = jnp.transpose(outputs.astype(jnp.float32), (0, 2, 1))
    out_cf = jnp.pad(out_cf, ((0, 0), (0, 0), (0, pad))).reshape(B, CH, R, 128)
    msk_cf = jnp.pad(masks_cf, ((0, 0), (0, 0), (0, pad))).reshape(B, 2, R, 128)
    asg_cf = jnp.pad(assign_cf, ((0, 0), (0, 0), (0, pad))).reshape(B, 8, R, 128)

    res = pl.pallas_call(
        _loss_kernel,
        out_shape=jax.ShapeDtypeStruct((B, 8, 128), jnp.float32),
        grid_spec=pl.GridSpec(
            grid=(B, T),
            in_specs=[
                pl.BlockSpec((1, CH, TR, 128), lambda b, t: (b, 0, t, 0)),
                pl.BlockSpec((1, 2, TR, 128), lambda b, t: (b, 0, t, 0)),
                pl.BlockSpec((1, 8, TR, 128), lambda b, t: (b, 0, t, 0)),
            ],
            out_specs=pl.BlockSpec((1, 8, 128), lambda b, t: (b, 0, 0)),
        ),
        compiler_params=pltpu.CompilerParams(
            dimension_semantics=("parallel", "arbitrary")),
    )(out_cf, msk_cf, asg_cf)

    # final lane + batch reduction in the wrapper
    per_q = jnp.sum(res, axis=(0, 2))                      # (8,)
    total_loss_reg = per_q[0]
    total_loss_mask = per_q[1]
    total_loss_iou = per_q[2]
    total_loss_cls = per_q[3]
    num_m = jnp.maximum(per_q[4], 1.0)                     # clamp: avoid 0/0 NaN
    num_f = jnp.maximum(per_q[5], 1.0)
    num_g = jnp.maximum(jnp.sum(num_gt).astype(jnp.float32), 1.0)

    iou_loss = total_loss_iou / num_f
    reg_loss = total_loss_reg / num_f * 5.0
    cls_loss = total_loss_cls / num_f
    mask_loss = total_loss_mask / num_m * 2.0
    sum_loss = iou_loss + reg_loss + cls_loss + mask_loss

    out = {'total_loss': sum_loss, 'iou_loss': iou_loss, 'reg_loss': reg_loss,
           'cls_loss': cls_loss, 'mask_loss': mask_loss, 'num_fg': num_f / num_g}
    return out, num_gt


# ---------------------------------------------------------------------------
# Demo (small pyramid: sizes 16/8/4 -> 336 anchors, 128x128 image, 32x32 masks)
# ---------------------------------------------------------------------------
if __name__ == "__main__":
    key = jax.random.PRNGKey(0)
    k1, k2, k3, k4, k5 = jax.random.split(key, 5)

    SIZES = (16, 8, 4)
    LEVEL_STRIDES = (8, 16, 32)
    B, C = 2, 4
    CH = 6 + C
    A = sum(s * s for s in SIZES)                          # 336

    # anchor grids & strides (YOLOX-style, 128x128 image)
    grids_l, strides_l = [], []
    for s, st in zip(SIZES, LEVEL_STRIDES):
        ys, xs = jnp.meshgrid(jnp.arange(s), jnp.arange(s), indexing='ij')
        g = jnp.stack([xs.reshape(-1), ys.reshape(-1)], -1).astype(jnp.float32)
        grids_l.append(g)
        strides_l.append(jnp.full((s * s, 1), float(st), jnp.float32))
    grids = jnp.concatenate(grids_l, 0)                    # (A, 2)
    strides = jnp.concatenate(strides_l, 0)                # (A, 1)

    # decoded predictions: boxes near anchor centers (positive w/h) + logits
    centers = (grids + 0.5) * strides
    pred_cxcy = centers[None] + jax.random.normal(k1, (B, A, 2)) * 1.0
    pred_wh = jnp.exp(jax.random.normal(k2, (B, A, 2)) * 0.2) * strides[None] * 3.0
    logits = jax.random.normal(k3, (B, A, CH - 4)) * 0.5
    outputs = jnp.concatenate([pred_cxcy, pred_wh, logits], -1)   # (B, A, CH)

    # ground-truth targets: (B, MaxGT, 5) = [class(>0 valid), cx, cy, w, h]
    targets = jnp.zeros((B, 8, 5), jnp.float32)
    targets = targets.at[0, 0].set(jnp.array([1., 30., 40., 25., 30.]))
    targets = targets.at[0, 1].set(jnp.array([3., 80., 70., 40., 35.]))
    targets = targets.at[0, 2].set(jnp.array([2., 100., 20., 20., 30.]))
    targets = targets.at[1, 0].set(jnp.array([4., 60., 90., 30., 25.]))
    targets = targets.at[1, 1].set(jnp.array([2., 20., 100., 25., 35.]))

    masks = (jax.random.uniform(k4, (B, 32, 32, 2)) > 0.5).astype(jnp.float32)
    regs = jax.random.normal(k5, (B, A, 4))                # unused by forward
    use_augs = jnp.zeros((B,), jnp.bool_)                  # unused by forward

    out, num_gt = mynet_loss(targets, strides, grids, outputs, regs, masks,
                             use_augs, sizes=SIZES)
    out = jax.block_until_ready(out)
    num_gt_host = np.asarray(num_gt)
    loss_list = [-1 for g in num_gt_host if g == 0]        # matches torch: only -1 entries

    assert np.isfinite(float(out['total_loss']))
    print("KERNEL_OK")
</pallas_src>

<mosaic_0001>
module attributes {stable_mosaic.version = 11 : i64} {
  func.func @_loss_kernel(%arg0: i32, %arg1: i32, %arg2: memref<1x10x8x128xf32, #tpu.memory_space<vmem>>, %arg3: memref<1x2x8x128xf32, #tpu.memory_space<vmem>>, %arg4: memref<1x8x8x128xf32, #tpu.memory_space<vmem>>, %arg5: memref<1x8x128xf32, #tpu.memory_space<vmem>>) attributes {dimension_semantics = [#tpu.dimension_semantics<parallel>, #tpu.dimension_semantics<arbitrary>], iteration_bounds = array<i64: 2, 1>, scalar_prefetch = 0 : i64, scratch_operands = 0 : i64, tpu.core_type = #tpu.core_type<tc>, window_params = [{transform_indices = @transform_0, window_bounds = array<i64: 1, 10, 8, 128>}, {transform_indices = @transform_1, window_bounds = array<i64: 1, 2, 8, 128>}, {transform_indices = @transform_2, window_bounds = array<i64: 1, 8, 8, 128>}, {transform_indices = @transform_3, window_bounds = array<i64: 1, 8, 128>}]} {
    %c0_i32 = arith.constant 0 : i32
    %0 = arith.cmpi eq, %arg1, %c0_i32 : i32
    %1 = arith.extui %0 : i1 to i32
    %c0_i32_0 = arith.constant 0 : i32
    %2 = arith.cmpi ne, %1, %c0_i32_0 : i32
    scf.if %2 {
      %cst_142 = arith.constant 0.000000e+00 : f32
      %231 = vector.broadcast %cst_142 : f32 to vector<1x8x128xf32>
      %c0_143 = arith.constant 0 : index
      %c0_144 = arith.constant 0 : index
      %c0_145 = arith.constant 0 : index
      %232 = vector.load %arg5[%c0_143, %c0_144, %c0_145] : memref<1x8x128xf32, #tpu.memory_space<vmem>>, vector<1x8x128xf32>
      tpu.vector_store %arg5[%c0_143, %c0_144, %c0_145], %231 {strides = array<i32>} : memref<1x8x128xf32, #tpu.memory_space<vmem>>, vector<1x8x128xf32>,
    } else {
    }
    %c0 = arith.constant 0 : index
    %c0_1 = arith.constant 0 : index
    %c0_2 = arith.constant 0 : index
    %c0_3 = arith.constant 0 : index
    %3 = vector.load %arg4[%c0, %c0_1, %c0_2, %c0_3] : memref<1x8x8x128xf32, #tpu.memory_space<vmem>>, vector<1x1x8x128xf32>
    %4 = vector.shape_cast %3 : vector<1x1x8x128xf32> to vector<8x128xf32>
    %c0_4 = arith.constant 0 : index
    %c1 = arith.constant 1 : index
    %c0_5 = arith.constant 0 : index
    %c0_6 = arith.constant 0 : index
    %5 = vector.load %arg4[%c0_4, %c1, %c0_5, %c0_6] : memref<1x8x8x128xf32, #tpu.memory_space<vmem>>, vector<1x1x8x128xf32>
    %6 = vector.shape_cast %5 : vector<1x1x8x128xf32> to vector<8x128xf32>
    %c0_7 = arith.constant 0 : index
    %c2 = arith.constant 2 : index
    %c0_8 = arith.constant 0 : index
    %c0_9 = arith.constant 0 : index
    %7 = vector.load %arg4[%c0_7, %c2, %c0_8, %c0_9] : memref<1x8x8x128xf32, #tpu.memory_space<vmem>>, vector<1x1x8x128xf32>
    %8 = vector.shape_cast %7 : vector<1x1x8x128xf32> to vector<8x128xf32>
    %c0_10 = arith.constant 0 : index
    %c3 = arith.constant 3 : index
    %c0_11 = arith.constant 0 : index
    %c0_12 = arith.constant 0 : index
    %9 = vector.load %arg4[%c0_10, %c3, %c0_11, %c0_12] : memref<1x8x8x128xf32, #tpu.memory_space<vmem>>, vector<1x1x8x128xf32>
    %10 = vector.shape_cast %9 : vector<1x1x8x128xf32> to vector<8x128xf32>
    %c0_13 = arith.constant 0 : index
    %c4 = arith.constant 4 : index
    %c0_14 = arith.constant 0 : index
    %c0_15 = arith.constant 0 : index
    %11 = vector.load %arg4[%c0_13, %c4, %c0_14, %c0_15] : memref<1x8x8x128xf32, #tpu.memory_space<vmem>>, vector<1x1x8x128xf32>
    %12 = vector.shape_cast %11 : vector<1x1x8x128xf32> to vector<8x128xf32>
    %c0_16 = arith.constant 0 : index
    %c5 = arith.constant 5 : index
    %c0_17 = arith.constant 0 : index
    %c0_18 = arith.constant 0 : index
    %13 = vector.load %arg4[%c0_16, %c5, %c0_17, %c0_18] : memref<1x8x8x128xf32, #tpu.memory_space<vmem>>, vector<1x1x8x128xf32>
    %14 = vector.shape_cast %13 : vector<1x1x8x128xf32> to vector<8x128xf32>
    %c0_19 = arith.constant 0 : index
    %c6 = arith.constant 6 : index
    %c0_20 = arith.constant 0 : index
    %c0_21 = arith.constant 0 : index
    %15 = vector.load %arg4[%c0_19, %c6, %c0_20, %c0_21] : memref<1x8x8x128xf32, #tpu.memory_space<vmem>>, vector<1x1x8x128xf32>
    %16 = vector.shape_cast %15 : vector<1x1x8x128xf32> to vector<8x128xf32>
    %c0_22 = arith.constant 0 : index
    %c7 = arith.constant 7 : index
    %c0_23 = arith.constant 0 : index
    %c0_24 = arith.constant 0 : index
    %17 = vector.load %arg4[%c0_22, %c7, %c0_23, %c0_24] : memref<1x8x8x128xf32, #tpu.memory_space<vmem>>, vector<1x1x8x128xf32>
    %18 = vector.shape_cast %17 : vector<1x1x8x128xf32> to vector<8x128xf32>
    %c0_25 = arith.constant 0 : index
    %c0_26 = arith.constant 0 : index
    %c0_27 = arith.constant 0 : index
    %c0_28 = arith.constant 0 : index
    %19 = vector.load %arg2[%c0_25, %c0_26, %c0_27, %c0_28] : memref<1x10x8x128xf32, #tpu.memory_space<vmem>>, vector<1x1x8x128xf32>
    %20 = vector.shape_cast %19 : vector<1x1x8x128xf32> to vector<8x128xf32>
    %c0_29 = arith.constant 0 : index
    %c1_30 = arith.constant 1 : index
    %c0_31 = arith.constant 0 : index
    %c0_32 = arith.constant 0 : index
    %21 = vector.load %arg2[%c0_29, %c1_30, %c0_31, %c0_32] : memref<1x10x8x128xf32, #tpu.memory_space<vmem>>, vector<1x1x8x128xf32>
    %22 = vector.shape_cast %21 : vector<1x1x8x128xf32> to vector<8x128xf32>
    %c0_33 = arith.constant 0 : index
    %c2_34 = arith.constant 2 : index
    %c0_35 = arith.constant 0 : index
    %c0_36 = arith.constant 0 : index
    %23 = vector.load %arg2[%c0_33, %c2_34, %c0_35, %c0_36] : memref<1x10x8x128xf32, #tpu.memory_space<vmem>>, vector<1x1x8x128xf32>
    %24 = vector.shape_cast %23 : vector<1x1x8x128xf32> to vector<8x128xf32>
    %c0_37 = arith.constant 0 : index
    %c3_38 = arith.constant 3 : index
    %c0_39 = arith.constant 0 : index
    %c0_40 = arith.constant 0 : index
    %25 = vector.load %arg2[%c0_37, %c3_38, %c0_39, %c0_40] : memref<1x10x8x128xf32, #tpu.memory_space<vmem>>, vector<1x1x8x128xf32>
    %26 = vector.shape_cast %25 : vector<1x1x8x128xf32> to vector<8x128xf32>
    %cst = arith.constant 5.000000e-01 : f32
    %27 = vector.broadcast %cst : f32 to vector<8x128xf32>
    %28 = arith.mulf %27, %24 : vector<8x128xf32>
    %29 = arith.subf %20, %28 : vector<8x128xf32>
    %cst_41 = arith.constant 5.000000e-01 : f32
    %30 = vector.broadcast %cst_41 : f32 to vector<8x128xf32>
    %31 = arith.mulf %30, %10 : vector<8x128xf32>
    %32 = arith.subf %6, %31 : vector<8x128xf32>
    %33 = arith.maximumf %29, %32 : vector<8x128xf32>
    %cst_42 = arith.constant 5.000000e-01 : f32
    %34 = vector.broadcast %cst_42 : f32 to vector<8x128xf32>
    %35 = arith.mulf %34, %26 : vector<8x128xf32>
    %36 = arith.subf %22, %35 : vector<8x128xf32>
    %cst_43 = arith.constant 5.000000e-01 : f32
    %37 = vector.broadcast %cst_43 : f32 to vector<8x128xf32>
    %38 = arith.mulf %37, %12 : vector<8x128xf32>
    %39 = arith.subf %8, %38 : vector<8x128xf32>
    %40 = arith.maximumf %36, %39 : vector<8x128xf32>
    %cst_44 = arith.constant 5.000000e-01 : f32
    %41 = vector.broadcast %cst_44 : f32 to vector<8x128xf32>
    %42 = arith.mulf %41, %24 : vector<8x128xf32>
    %43 = arith.addf %20, %42 : vector<8x128xf32>
    %cst_45 = arith.constant 5.000000e-01 : f32
    %44 = vector.broadcast %cst_45 : f32 to vector<8x128xf32>
    %45 = arith.mulf %44, %10 : vector<8x128xf32>
    %46 = arith.addf %6, %45 : vector<8x128xf32>
    %47 = arith.minimumf %43, %46 : vector<8x128xf32>
    %cst_46 = arith.constant 5.000000e-01 : f32
    %48 = vector.broadcast %cst_46 : f32 to vector<8x128xf32>
    %49 = arith.mulf %48, %26 : vector<8x128xf32>
    %50 = arith.addf %22, %49 : vector<8x128xf32>
    %cst_47 = arith.constant 5.000000e-01 : f32
    %51 = vector.broadcast %cst_47 : f32 to vector<8x128xf32>
    %52 = arith.mulf %51, %12 : vector<8x128xf32>
    %53 = arith.addf %8, %52 : vector<8x128xf32>
    %54 = arith.minimumf %50, %53 : vector<8x128xf32>
    %55 = arith.subf %47, %33 : vector<8x128xf32>
    %cst_48 = arith.constant 0.000000e+00 : f32
    %56 = vector.broadcast %cst_48 : f32 to vector<8x128xf32>
    %57 = arith.maximumf %55, %56 : vector<8x128xf32>
    %58 = arith.subf %54, %40 : vector<8x128xf32>
    %cst_49 = arith.constant 0.000000e+00 : f32
    %59 = vector.broadcast %cst_49 : f32 to vector<8x128xf32>
    %60 = arith.maximumf %58, %59 : vector<8x128xf32>
    %61 = arith.mulf %57, %60 : vector<8x128xf32>
    %62 = arith.mulf %24, %26 : vector<8x128xf32>
    %63 = arith.mulf %10, %12 : vector<8x128xf32>
    %64 = arith.addf %62, %63 : vector<8x128xf32>
    %65 = arith.subf %64, %61 : vector<8x128xf32>
    %cst_50 = arith.constant 1.000000e-16 : f32
    %66 = vector.broadcast %cst_50 : f32 to vector<8x128xf32>
    %67 = arith.addf %65, %66 : vector<8x128xf32>
    %68 = arith.divf %61, %67 : vector<8x128xf32>
    %69 = arith.mulf %68, %68 : vector<8x128xf32>
    %cst_51 = arith.constant 1.000000e+00 : f32
    %70 = vector.broadcast %cst_51 : f32 to vector<8x128xf32>
    %71 = arith.subf %70, %69 : vector<8x128xf32>
    %72 = arith.mulf %71, %4 : vector<8x128xf32>
    %c0_52 = arith.constant 0 : index
    %c0_53 = arith.constant 0 : index
    %c0_54 = arith.constant 0 : index
    %c0_55 = arith.constant 0 : index
    %73 = vector.load %arg3[%c0_52, %c0_53, %c0_54, %c0_55] : memref<1x2x8x128xf32, #tpu.memory_space<vmem>>, vector<1x1x8x128xf32>
    %74 = vector.shape_cast %73 : vector<1x1x8x128xf32> to vector<8x128xf32>
    %c0_56 = arith.constant 0 : index
    %c1_57 = arith.constant 1 : index
    %c0_58 = arith.constant 0 : index
    %c0_59 = arith.constant 0 : index
    %75 = vector.load %arg3[%c0_56, %c1_57, %c0_58, %c0_59] : memref<1x2x8x128xf32, #tpu.memory_space<vmem>>, vector<1x1x8x128xf32>
    %76 = vector.shape_cast %75 : vector<1x1x8x128xf32> to vector<8x128xf32>
    %77 = arith.addf %74, %76 : vector<8x128xf32>
    %cst_60 = arith.constant 0.000000e+00 : f32
    %78 = vector.broadcast %cst_60 : f32 to vector<8x128xf32>
    %79 = arith.cmpf ogt, %77, %78 : vector<8x128xf32>
    %80 = arith.extui %79 : vector<8x128xi1> to vector<8x128xi32>
    %81 = arith.sitofp %80 : vector<8x128xi32> to vector<8x128xf32>
    %82 = arith.mulf %81, %18 : vector<8x128xf32>
    %c0_61 = arith.constant 0 : index
    %c4_62 = arith.constant 4 : index
    %c0_63 = arith.constant 0 : index
    %c0_64 = arith.constant 0 : index
    %83 = vector.load %arg2[%c0_61, %c4_62, %c0_63, %c0_64] : memref<1x10x8x128xf32, #tpu.memory_space<vmem>>, vector<1x1x8x128xf32>
    %84 = vector.shape_cast %83 : vector<1x1x8x128xf32> to vector<8x128xf32>
    %cst_65 = arith.constant 0.000000e+00 : f32
    %85 = vector.broadcast %cst_65 : f32 to vector<8x128xf32>
    %86 = arith.maximumf %84, %85 : vector<8x128xf32>
    %87 = arith.mulf %84, %76 : vector<8x128xf32>
    %88 = arith.subf %86, %87 : vector<8x128xf32>
    %89 = math.absf %84 : vector<8x128xf32>
    %cst_66 = arith.constant 0.000000e+00 : f32
    %90 = vector.broadcast %cst_66 : f32 to vector<8x128xf32>
    %91 = arith.subf %90, %89 : vector<8x128xf32>
    %92 = math.exp %91 : vector<8x128xf32>
    %93 = math.log1p %92 : vector<8x128xf32>
    %94 = arith.addf %88, %93 : vector<8x128xf32>
    %95 = arith.mulf %94, %82 : vector<8x128xf32>
    %c0_67 = arith.constant 0 : index
    %c5_68 = arith.constant 5 : index
    %c0_69 = arith.constant 0 : index
    %c0_70 = arith.constant 0 : index
    %96 = vector.load %arg2[%c0_67, %c5_68, %c0_69, %c0_70] : memref<1x10x8x128xf32, #tpu.memory_space<vmem>>, vector<1x1x8x128xf32>
    %97 = vector.shape_cast %96 : vector<1x1x8x128xf32> to vector<8x128xf32>
    %cst_71 = arith.constant 0.000000e+00 : f32
    %98 = vector.broadcast %cst_71 : f32 to vector<8x128xf32>
    %99 = arith.maximumf %97, %98 : vector<8x128xf32>
    %100 = arith.mulf %97, %14 : vector<8x128xf32>
    %101 = arith.subf %99, %100 : vector<8x128xf32>
    %102 = math.absf %97 : vector<8x128xf32>
    %cst_72 = arith.constant 0.000000e+00 : f32
    %103 = vector.broadcast %cst_72 : f32 to vector<8x128xf32>
    %104 = arith.subf %103, %102 : vector<8x128xf32>
    %105 = math.exp %104 : vector<8x128xf32>
    %106 = math.log1p %105 : vector<8x128xf32>
    %107 = arith.addf %101, %106 : vector<8x128xf32>
    %108 = arith.mulf %107, %4 : vector<8x128xf32>
    %cst_73 = arith.constant 0.000000e+00 : f32
    %109 = vector.broadcast %cst_73 : f32 to vector<8x128xf32>
    %cst_74 = arith.constant 0.000000e+00 : f32
    %110 = vector.broadcast %cst_74 : f32 to vector<8x128xf32>
    %111 = arith.cmpf oeq, %16, %110 : vector<8x128xf32>
    %112 = arith.extui %111 : vector<8x128xi1> to vector<8x128xi32>
    %113 = arith.sitofp %112 : vector<8x128xi32> to vector<8x128xf32>
    %114 = arith.mulf %4, %113 : vector<8x128xf32>
    %c0_75 = arith.constant 0 : index
    %c6_76 = arith.constant 6 : index
    %c0_77 = arith.constant 0 : index
    %c0_78 = arith.constant 0 : index
    %115 = vector.load %arg2[%c0_75, %c6_76, %c0_77, %c0_78] : memref<1x10x8x128xf32, #tpu.memory_space<vmem>>, vector<1x1x8x128xf32>
    %116 = vector.shape_cast %115 : vector<1x1x8x128xf32> to vector<8x128xf32>
    %cst_79 = arith.constant 0.000000e+00 : f32
    %117 = vector.broadcast %cst_79 : f32 to vector<8x128xf32>
    %118 = arith.maximumf %116, %117 : vector<8x128xf32>
    %119 = arith.mulf %116, %114 : vector<8x128xf32>
    %120 = arith.subf %118, %119 : vector<8x128xf32>
    %121 = math.absf %116 : vector<8x128xf32>
    %cst_80 = arith.constant 0.000000e+00 : f32
    %122 = vector.broadcast %cst_80 : f32 to vector<8x128xf32>
    %123 = arith.subf %122, %121 : vector<8x128xf32>
    %124 = math.exp %123 : vector<8x128xf32>
    %125 = math.log1p %124 : vector<8x128xf32>
    %126 = arith.addf %120, %125 : vector<8x128xf32>
    %127 = arith.addf %109, %126 : vector<8x128xf32>
    %cst_81 = arith.constant 1.000000e+00 : f32
    %128 = vector.broadcast %cst_81 : f32 to vector<8x128xf32>
    %129 = arith.cmpf oeq, %16, %128 : vector<8x128xf32>
    %130 = arith.extui %129 : vector<8x128xi1> to vector<8x128xi32>
    %131 = arith.sitofp %130 : vector<8x128xi32> to vector<8x128xf32>
    %132 = arith.mulf %4, %131 : vector<8x128xf32>
    %c0_82 = arith.constant 0 : index
    %c7_83 = arith.constant 7 : index
    %c0_84 = arith.constant 0 : index
    %c0_85 = arith.constant 0 : index
    %133 = vector.load %arg2[%c0_82, %c7_83, %c0_84, %c0_85] : memref<1x10x8x128xf32, #tpu.memory_space<vmem>>, vector<1x1x8x128xf32>
    %134 = vector.shape_cast %133 : vector<1x1x8x128xf32> to vector<8x128xf32>
    %cst_86 = arith.constant 0.000000e+00 : f32
    %135 = vector.broadcast %cst_86 : f32 to vector<8x128xf32>
    %136 = arith.maximumf %134, %135 : vector<8x128xf32>
    %137 = arith.mulf %134, %132 : vector<8x128xf32>
    %138 = arith.subf %136, %137 : vector<8x128xf32>
    %139 = math.absf %134 : vector<8x128xf32>
    %cst_87 = arith.constant 0.000000e+00 : f32
    %140 = vector.broadcast %cst_87 : f32 to vector<8x128xf32>
    %141 = arith.subf %140, %139 : vector<8x128xf32>
    %142 = math.exp %141 : vector<8x128xf32>
    %143 = math.log1p %142 : vector<8x128xf32>
    %144 = arith.addf %138, %143 : vector<8x128xf32>
    %145 = arith.addf %127, %144 : vector<8x128xf32>
    %cst_88 = arith.constant 2.000000e+00 : f32
    %146 = vector.broadcast %cst_88 : f32 to vector<8x128xf32>
    %147 = arith.cmpf oeq, %16, %146 : vector<8x128xf32>
    %148 = arith.extui %147 : vector<8x128xi1> to vector<8x128xi32>
    %149 = arith.sitofp %148 : vector<8x128xi32> to vector<8x128xf32>
    %150 = arith.mulf %4, %149 : vector<8x128xf32>
    %c0_89 = arith.constant 0 : index
    %c8 = arith.constant 8 : index
    %c0_90 = arith.constant 0 : index
    %c0_91 = arith.constant 0 : index
    %151 = vector.load %arg2[%c0_89, %c8, %c0_90, %c0_91] : memref<1x10x8x128xf32, #tpu.memory_space<vmem>>, vector<1x1x8x128xf32>
    %152 = vector.shape_cast %151 : vector<1x1x8x128xf32> to vector<8x128xf32>
    %cst_92 = arith.constant 0.000000e+00 : f32
    %153 = vector.broadcast %cst_92 : f32 to vector<8x128xf32>
    %154 = arith.maximumf %152, %153 : vector<8x128xf32>
    %155 = arith.mulf %152, %150 : vector<8x128xf32>
    %156 = arith.subf %154, %155 : vector<8x128xf32>
    %157 = math.absf %152 : vector<8x128xf32>
    %cst_93 = arith.constant 0.000000e+00 : f32
    %158 = vector.broadcast %cst_93 : f32 to vector<8x128xf32>
    %159 = arith.subf %158, %157 : vector<8x128xf32>
    %160 = math.exp %159 : vector<8x128xf32>
    %161 = math.log1p %160 : vector<8x128xf32>
    %162 = arith.addf %156, %161 : vector<8x128xf32>
    %163 = arith.addf %145, %162 : vector<8x128xf32>
    %cst_94 = arith.constant 3.000000e+00 : f32
    %164 = vector.broadcast %cst_94 : f32 to vector<8x128xf32>
    %165 = arith.cmpf oeq, %16, %164 : vector<8x128xf32>
    %166 = arith.extui %165 : vector<8x128xi1> to vector<8x128xi32>
    %167 = arith.sitofp %166 : vector<8x128xi32> to vector<8x128xf32>
    %168 = arith.mulf %4, %167 : vector<8x128xf32>
    %c0_95 = arith.constant 0 : index
    %c9 = arith.constant 9 : index
    %c0_96 = arith.constant 0 : index
    %c0_97 = arith.constant 0 : index
    %169 = vector.load %arg2[%c0_95, %c9, %c0_96, %c0_97] : memref<1x10x8x128xf32, #tpu.memory_space<vmem>>, vector<1x1x8x128xf32>
    %170 = vector.shape_cast %169 : vector<1x1x8x128xf32> to vector<8x128xf32>
    %cst_98 = arith.constant 0.000000e+00 : f32
    %171 = vector.broadcast %cst_98 : f32 to vector<8x128xf32>
    %172 = arith.maximumf %170, %171 : vector<8x128xf32>
    %173 = arith.mulf %170, %168 : vector<8x128xf32>
    %174 = arith.subf %172, %173 : vector<8x128xf32>
    %175 = math.absf %170 : vector<8x128xf32>
    %cst_99 = arith.constant 0.000000e+00 : f32
    %176 = vector.broadcast %cst_99 : f32 to vector<8x128xf32>
    %177 = arith.subf %176, %175 : vector<8x128xf32>
    %178 = math.exp %177 : vector<8x128xf32>
    %179 = math.log1p %178 : vector<8x128xf32>
    %180 = arith.addf %174, %179 : vector<8x128xf32>
    %181 = arith.addf %163, %180 : vector<8x128xf32>
    %182 = arith.mulf %181, %18 : vector<8x128xf32>
    %c0_100 = arith.constant 0 : index
    %c0_101 = arith.constant 0 : index
    %c0_102 = arith.constant 0 : index
    %183 = vector.load %arg5[%c0_100, %c0_101, %c0_102] : memref<1x8x128xf32, #tpu.memory_space<vmem>>, vector<1x1x128xf32>
    %184 = vector.shape_cast %183 : vector<1x1x128xf32> to vector<1x128xf32>
    %cst_103 = arith.constant dense<0.000000e+00> : vector<128xf32>
    %185 = vector.multi_reduction <add>, %72, %cst_103 [0] : vector<8x128xf32> to vector<128xf32>
    %186 = vector.shape_cast %185 : vector<128xf32> to vector<1x128xf32>
    %187 = arith.addf %184, %186 : vector<1x128xf32>
    %c0_104 = arith.constant 0 : index
    %c0_105 = arith.constant 0 : index
    %c0_106 = arith.constant 0 : index
    %188 = vector.load %arg5[%c0_104, %c0_105, %c0_106] : memref<1x8x128xf32, #tpu.memory_space<vmem>>, vector<1x1x128xf32>
    %189 = vector.shape_cast %188 : vector<1x1x128xf32> to vector<1x128xf32>
    %190 = vector.shape_cast %187 : vector<1x128xf32> to vector<1x1x128xf32>
    tpu.vector_store %arg5[%c0_104, %c0_105, %c0_106], %190 {strides = array<i32>} : memref<1x8x128xf32, #tpu.memory_space<vmem>>, vector<1x1x128xf32>,
    %c0_107 = arith.constant 0 : index
    %c1_108 = arith.constant 1 : index
    %c0_109 = arith.constant 0 : index
    %191 = vector.load %arg5[%c0_107, %c1_108, %c0_109] : memref<1x8x128xf32, #tpu.memory_space<vmem>>, vector<1x1x128xf32>
    %192 = vector.shape_cast %191 : vector<1x1x128xf32> to vector<1x128xf32>
    %cst_110 = arith.constant dense<0.000000e+00> : vector<128xf32>
    %193 = vector.multi_reduction <add>, %95, %cst_110 [0] : vector<8x128xf32> to vector<128xf32>
    %194 = vector.shape_cast %193 : vector<128xf32> to vector<1x128xf32>
    %195 = arith.addf %192, %194 : vector<1x128xf32>
    %c0_111 = arith.constant 0 : index
    %c1_112 = arith.constant 1 : index
    %c0_113 = arith.constant 0 : index
    %196 = vector.load %arg5[%c0_111, %c1_112, %c0_113] : memref<1x8x128xf32, #tpu.memory_space<vmem>>, vector<1x1x128xf32>
    %197 = vector.shape_cast %196 : vector<1x1x128xf32> to vector<1x128xf32>
    %198 = vector.shape_cast %195 : vector<1x128xf32> to vector<1x1x128xf32>
    tpu.vector_store %arg5[%c0_111, %c1_112, %c0_113], %198 {strides = array<i32>} : memref<1x8x128xf32, #tpu.memory_space<vmem>>, vector<1x1x128xf32>,
    %c0_114 = arith.constant 0 : index
    %c2_115 = arith.constant 2 : index
    %c0_116 = arith.constant 0 : index
    %199 = vector.load %arg5[%c0_114, %c2_115, %c0_116] : memref<1x8x128xf32, #tpu.memory_space<vmem>>, vector<1x1x128xf32>
    %200 = vector.shape_cast %199 : vector<1x1x128xf32> to vector<1x128xf32>
    %cst_117 = arith.constant dense<0.000000e+00> : vector<128xf32>
    %201 = vector.multi_reduction <add>, %108, %cst_117 [0] : vector<8x128xf32> to vector<128xf32>
    %202 = vector.shape_cast %201 : vector<128xf32> to vector<1x128xf32>
    %203 = arith.addf %200, %202 : vector<1x128xf32>
    %c0_118 = arith.constant 0 : index
    %c2_119 = arith.constant 2 : index
    %c0_120 = arith.constant 0 : index
    %204 = vector.load %arg5[%c0_118, %c2_119, %c0_120] : memref<1x8x128xf32, #tpu.memory_space<vmem>>, vector<1x1x128xf32>
    %205 = vector.shape_cast %204 : vector<1x1x128xf32> to vector<1x128xf32>
    %206 = vector.shape_cast %203 : vector<1x128xf32> to vector<1x1x128xf32>
    tpu.vector_store %arg5[%c0_118, %c2_119, %c0_120], %206 {strides = array<i32>} : memref<1x8x128xf32, #tpu.memory_space<vmem>>, vector<1x1x128xf32>,
    %c0_121 = arith.constant 0 : index
    %c3_122 = arith.constant 3 : index
    %c0_123 = arith.constant 0 : index
    %207 = vector.load %arg5[%c0_121, %c3_122, %c0_123] : memref<1x8x128xf32, #tpu.memory_space<vmem>>, vector<1x1x128xf32>
    %208 = vector.shape_cast %207 : vector<1x1x128xf32> to vector<1x128xf32>
    %cst_124 = arith.constant dense<0.000000e+00> : vector<128xf32>
    %209 = vector.multi_reduction <add>, %182, %cst_124 [0] : vector<8x128xf32> to vector<128xf32>
    %210 = vector.shape_cast %209 : vector<128xf32> to vector<1x128xf32>
    %211 = arith.addf %208, %210 : vector<1x128xf32>
    %c0_125 = arith.constant 0 : index
    %c3_126 = arith.constant 3 : index
    %c0_127 = arith.constant 0 : index
    %212 = vector.load %arg5[%c0_125, %c3_126, %c0_127] : memref<1x8x128xf32, #tpu.memory_space<vmem>>, vector<1x1x128xf32>
    %213 = vector.shape_cast %212 : vector<1x1x128xf32> to vector<1x128xf32>
    %214 = vector.shape_cast %211 : vector<1x128xf32> to vector<1x1x128xf32>
    tpu.vector_store %arg5[%c0_125, %c3_126, %c0_127], %214 {strides = array<i32>} : memref<1x8x128xf32, #tpu.memory_space<vmem>>, vector<1x1x128xf32>,
    %c0_128 = arith.constant 0 : index
    %c4_129 = arith.constant 4 : index
    %c0_130 = arith.constant 0 : index
    %215 = vector.load %arg5[%c0_128, %c4_129, %c0_130] : memref<1x8x128xf32, #tpu.memory_space<vmem>>, vector<1x1x128xf32>
    %216 = vector.shape_cast %215 : vector<1x1x128xf32> to vector<1x128xf32>
    %cst_131 = arith.constant dense<0.000000e+00> : vector<128xf32>
    %217 = vector.multi_reduction <add>, %82, %cst_131 [0] : vector<8x128xf32> to vector<128xf32>
    %218 = vector.shape_cast %217 : vector<128xf32> to vector<1x128xf32>
    %219 = arith.addf %216, %218 : vector<1x128xf32>
    %c0_132 = arith.constant 0 : index
    %c4_133 = arith.constant 4 : index
    %c0_134 = arith.constant 0 : index
    %220 = vector.load %arg5[%c0_132, %c4_133, %c0_134] : memref<1x8x128xf32, #tpu.memory_space<vmem>>, vector<1x1x128xf32>
    %221 = vector.shape_cast %220 : vector<1x1x128xf32> to vector<1x128xf32>
    %222 = vector.shape_cast %219 : vector<1x128xf32> to vector<1x1x128xf32>
    tpu.vector_store %arg5[%c0_132, %c4_133, %c0_134], %222 {strides = array<i32>} : memref<1x8x128xf32, #tpu.memory_space<vmem>>, vector<1x1x128xf32>,
    %c0_135 = arith.constant 0 : index
    %c5_136 = arith.constant 5 : index
    %c0_137 = arith.constant 0 : index
    %223 = vector.load %arg5[%c0_135, %c5_136, %c0_137] : memref<1x8x128xf32, #tpu.memory_space<vmem>>, vector<1x1x128xf32>
    %224 = vector.shape_cast %223 : vector<1x1x128xf32> to vector<1x128xf32>
    %cst_138 = arith.constant dense<0.000000e+00> : vector<128xf32>
    %225 = vector.multi_reduction <add>, %4, %cst_138 [0] : vector<8x128xf32> to vector<128xf32>
    %226 = vector.shape_cast %225 : vector<128xf32> to vector<1x128xf32>
    %227 = arith.addf %224, %226 : vector<1x128xf32>
    %c0_139 = arith.constant 0 : index
    %c5_140 = arith.constant 5 : index
    %c0_141 = arith.constant 0 : index
    %228 = vector.load %arg5[%c0_139, %c5_140, %c0_141] : memref<1x8x128xf32, #tpu.memory_space<vmem>>, vector<1x1x128xf32>
    %229 = vector.shape_cast %228 : vector<1x1x128xf32> to vector<1x128xf32>
    %230 = vector.shape_cast %227 : vector<1x128xf32> to vector<1x1x128xf32>
    tpu.vector_store %arg5[%c0_139, %c5_140, %c0_141], %230 {strides = array<i32>} : memref<1x8x128xf32, #tpu.memory_space<vmem>>, vector<1x1x128xf32>,
    return
  }
  func.func @transform_0(%arg0: i32, %arg1: i32) -> (i32, i32, i32, i32) {
    %c0_i32 = arith.constant 0 : i32
    %c0_i32_0 = arith.constant 0 : i32
    %c0_i32_1 = arith.constant 0 : i32
    return %arg0, %c0_i32, %arg1, %c0_i32_0 : i32, i32, i32, i32
  }
  func.func @transform_1(%arg0: i32, %arg1: i32) -> (i32, i32, i32, i32) {
    %c0_i32 = arith.constant 0 : i32
    %c0_i32_0 = arith.constant 0 : i32
    %c0_i32_1 = arith.constant 0 : i32
    return %arg0, %c0_i32, %arg1, %c0_i32_0 : i32, i32, i32, i32
  }
  func.func @transform_2(%arg0: i32, %arg1: i32) -> (i32, i32, i32, i32) {
    %c0_i32 = arith.constant 0 : i32
    %c0_i32_0 = arith.constant 0 : i32
    %c0_i32_1 = arith.constant 0 : i32
    return %arg0, %c0_i32, %arg1, %c0_i32_0 : i32, i32, i32, i32
  }
  func.func @transform_3(%arg0: i32, %arg1: i32) -> (i32, i32, i32) {
    %c0_i32 = arith.constant 0 : i32
    %c0_i32_0 = arith.constant 0 : i32
    %c0_i32_1 = arith.constant 0 : i32
    return %arg0, %c0_i32, %c0_i32_0 : i32, i32, i32
  }
}

</mosaic_0001>

<llo_original>
// kernel: mynet_loss.1
$region0: #{mynet_loss.1}
  #allocation0 [shape = 'u32[]', space=smem, size = 0x4, offset = 0x4, fixed_abs, tag = 'smem constant byte address 0x4 - core index']
  #allocation1 [shape = 'u32[144,128]{1,0:T(1,128)}', space=vmem, size = 0x12000, scoped, tag = 'internal scratch']
  %s0 = inlined_call_operand.vmem [shape: f32[2,10,8,128], index: 0, kind: input, shape index: {}]
  %s1 = inlined_call_operand.vmem [shape: f32[2,2,8,128], index: 1, kind: input, shape index: {}]
  %s2 = inlined_call_operand.vmem [shape: f32[2,8,8,128], index: 2, kind: input, shape index: {}]
  %s3 = inlined_call_operand.vmem [shape: f32[2,8,128], index: 3, kind: output, shape index: {}]
  %s4 = sld [smem:[#allocation0]]
  $region49: #{mynet_loss.1} parent=0
    _
  %s6 = ssub.s32 1, %s4
  %s7 = scalar_select 0, %s6, %s4
  loop: start=0, step=1, limit=4
  $region2: #{mynet_loss.1} parent=0 // loop_pre_header
    _
  $region3: #{mynet_loss.1} parent=0 // loop_header
    %s9 = sphi 0, %s13
    %p10 = scmp.ge.s32.totalorder %s9, 4
    %s16 = sphi 0, %s28
    %s17 = sphi 0, %s24
    %s18 = sphi 0, %s16
    %s19 = sphi 0, %s17
    %s20 = sphi 0, %s18
    %s21 = sphi 0, %s19
    %s33 = sphi 0, %s35
    %s36 = sphi 0, %s33
    %s37 = sphi 0, %s36
    %s53 = sphi 0, %s37
    %s61 = sphi 0, %s63
    %s64 = sphi 0, %s61
    %s65 = sphi 0, %s64
    %s81 = sphi 0, %s65
    %s89 = sphi 0, %s91
    %s92 = sphi 0, %s89
    %s93 = sphi 0, %s92
    %s109 = sphi 0, %s93
    %s115 = sphi 0, %s117
    %s118 = sphi 0, %s115
    %s119 = sphi 0, %s118
    %s135 = sphi 0, %s119
  $region4: #{mynet_loss.1} parent=0 // loop_header_branch
    %12 = sbr.rel (%p10) target = $region8
  $region5: #{mynet_loss.1} parent=0 // loop_body
    %s14 = ssub.s32 %s9, 1
    %s15 = ssub.s32 %s9, 2
    %s22 = sadd.s32 1, %s17
    %p23 = scmp.ge.s32.totalorder %s22, 1
    %s24 = scalar_select %p23, 0, %s22
    %s25 = sadd.s32 1, %s16
    %s26 = scalar_select %p23, %s25, %s16
    %p27 = scmp.ge.s32.totalorder %s26, 2
    %s28 = scalar_select %p27, 0, %s26
    %s29 = ssub.s32 %s16, %s28
    %s30 = ssub.s32 %s17, %s24
    %s31 = sor.u32 %s29, %s30
    %p32 = scmp.eq.s32.totalorder %s31, 0
    %s34 = sadd.s32 %s33, 1
    %s35 = scalar_select %p32, %s33, %s34
    %p38 = pneg %p32
    %p39 = scmp.eq.s32.totalorder %s9, 1
    %p40 = por %p38, %p39
    %p41 = scmp.ne.s32.totalorder %s33, %s36
    %p42 = scmp.eq.s32.totalorder %s9, 0
    %p43 = por %p41, %p42
    %p44 = scmp.ne.s32.totalorder %s33, %s36
    %p45 = scmp.eq.s32.totalorder %s14, 1
    %p46 = por %p44, %p45
    %p47 = scmp.ne.s32.totalorder %s36, %s37
    %p48 = scmp.eq.s32.totalorder %s14, 0
    %p49 = por %p47, %p48
    %p50 = scmp.ne.s32.totalorder %s36, %s37
    %p51 = scmp.eq.s32.totalorder %s15, 1
    %p52 = por %p50, %p51
    %p54 = scmp.ne.s32.totalorder %s37, %s53
    %p55 = scmp.eq.s32.totalorder %s15, 0
    %p56 = por %p54, %p55
    %s57 = ssub.s32 %s16, %s28
    %s58 = ssub.s32 %s17, %s24
    %s59 = sor.u32 %s57, %s58
    %p60 = scmp.eq.s32.totalorder %s59, 0
    %s62 = sadd.s32 %s61, 1
    %s63 = scalar_select %p60, %s61, %s62
    %p66 = pneg %p60
    %p67 = scmp.eq.s32.totalorder %s9, 1
    %p68 = por %p66, %p67
    %p69 = scmp.ne.s32.totalorder %s61, %s64
    %p70 = scmp.eq.s32.totalorder %s9, 0
    %p71 = por %p69, %p70
    %p72 = scmp.ne.s32.totalorder %s61, %s64
    %p73 = scmp.eq.s32.totalorder %s14, 1
    %p74 = por %p72, %p73
    %p75 = scmp.ne.s32.totalorder %s64, %s65
    %p76 = scmp.eq.s32.totalorder %s14, 0
    %p77 = por %p75, %p76
    %p78 = scmp.ne.s32.totalorder %s64, %s65
    %p79 = scmp.eq.s32.totalorder %s15, 1
    %p80 = por %p78, %p79
    %p82 = scmp.ne.s32.totalorder %s65, %s81
    %p83 = scmp.eq.s32.totalorder %s15, 0
    %p84 = por %p82, %p83
    %s85 = ssub.s32 %s16, %s28
    %s86 = ssub.s32 %s17, %s24
    %s87 = sor.u32 %s85, %s86
    %p88 = scmp.eq.s32.totalorder %s87, 0
    %s90 = sadd.s32 %s89, 1
    %s91 = scalar_select %p88, %s89, %s90
    %p94 = pneg %p88
    %p95 = scmp.eq.s32.totalorder %s9, 1
    %p96 = por %p94, %p95
    %p97 = scmp.ne.s32.totalorder %s89, %s92
    %p98 = scmp.eq.s32.totalorder %s9, 0
    %p99 = por %p97, %p98
    %p100 = scmp.ne.s32.totalorder %s89, %s92
    %p101 = scmp.eq.s32.totalorder %s14, 1
    %p102 = por %p100, %p101
    %p103 = scmp.ne.s32.totalorder %s92, %s93
    %p104 = scmp.eq.s32.totalorder %s14, 0
    %p105 = por %p103, %p104
    %p106 = scmp.ne.s32.totalorder %s92, %s93
    %p107 = scmp.eq.s32.totalorder %s15, 1
    %p108 = por %p106, %p107
    %p110 = scmp.ne.s32.totalorder %s93, %s109
    %p111 = scmp.eq.s32.totalorder %s15, 0
    %p112 = por %p110, %p111
    %s113 = ssub.s32 %s16, %s28
    %p114 = scmp.eq.s32.totalorder %s113, 0
    %s116 = sadd.s32 %s115, 1
    %s117 = scalar_select %p114, %s115, %s116
    %p120 = pneg %p114
    %p121 = scmp.eq.s32.totalorder %s9, 1
    %p122 = por %p120, %p121
    %p123 = scmp.ne.s32.totalorder %s115, %s118
    %p124 = scmp.eq.s32.totalorder %s9, 0
    %p125 = por %p123, %p124
    %p126 = scmp.ne.s32.totalorder %s115, %s118
    %p127 = scmp.eq.s32.totalorder %s14, 1
    %p128 = por %p126, %p127
    %p129 = scmp.ne.s32.totalorder %s118, %s119
    %p130 = scmp.eq.s32.totalorder %s14, 0
    %p131 = por %p129, %p130
    %p132 = scmp.ne.s32.totalorder %s118, %s119
    %p133 = scmp.eq.s32.totalorder %s15, 1
    %p134 = por %p132, %p133
    %p136 = scmp.ne.s32.totalorder %s119, %s135
    %p137 = scmp.eq.s32.totalorder %s15, 0
    %p138 = por %p136, %p137
    %p139 = scmp.le.s32.totalorder 1, %s9
    %p140 = scmp.lt.s32.totalorder %s9, 3
    %p141 = pnand %p139, %p140
    %p142 = pneg %p141
    // Predicated region
    $region9: #{mynet_loss.1} parent=5 // pred_check
      _
    $region10: #{mynet_loss.1} parent=5 // pred_check_branch
      %144 = sbr.rel (%p141) target = $region12
    $region11: #{mynet_loss.1} parent=5 // pred_region
      %s145 = ssub.s32 %s9, 1
    $region12: #{mynet_loss.1} parent=5 // pred_fallthru
      _
    %p146 = scmp.lt.s32.totalorder %s9, 2
    // Predicated region
    $region13: #{mynet_loss.1} parent=5 // pred_check
      %p147 = pneg %p146
    $region14: #{mynet_loss.1} parent=5 // pred_check_branch
      %149 = sbr.rel (%p147) target = $region16
    $region15: #{mynet_loss.1} parent=5 // pred_region
      // Predicated region
      $region17: #{mynet_loss.1} parent=15 // pred_check
        %p150 = pneg %p43
      $region18: #{mynet_loss.1} parent=15 // pred_check_branch
        %152 = sbr.rel (%p150) target = $region20
      $region19: #{mynet_loss.1} parent=15 // pred_region
        %p153 = scmp.lt.s32.totalorder %s16, 1
        %s154 = scalar_select %p153, %s16, 1
        %p155 = scmp.lt.s32.totalorder %s17, 0
        %s156 = scalar_select %p155, %s17, 0
        %s157 = smul.addr %s154, 10
        %s158 = sadd.s32 %s156, %s157
        %s159 = smul.addr %s158, 8
        %s160 = scalar_lea.vmem %s0, %s159
      $region20: #{mynet_loss.1} parent=15 // pred_fallthru
        _
      // Predicated region
      $region21: #{mynet_loss.1} parent=15 // pred_check
        %p161 = pneg %p71
      $region22: #{mynet_loss.1} parent=15 // pred_check_branch
        %163 = sbr.rel (%p161) target = $region24
      $region23: #{mynet_loss.1} parent=15 // pred_region
        %p164 = scmp.lt.s32.totalorder %s16, 1
        %s165 = scalar_select %p164, %s16, 1
        %p166 = scmp.lt.s32.totalorder %s17, 0
        %s167 = scalar_select %p166, %s17, 0
        %s168 = smul.addr %s165, 2
        %s169 = sadd.s32 %s167, %s168
        %s170 = smul.addr %s169, 8
        %s171 = scalar_lea.vmem %s1, %s170
      $region24: #{mynet_loss.1} parent=15 // pred_fallthru
        _
      // Predicated region
      $region25: #{mynet_loss.1} parent=15 // pred_check
        %p172 = pneg %p99
      $region26: #{mynet_loss.1} parent=15 // pred_check_branch
        %174 = sbr.rel (%p172) target = $region28
      $region27: #{mynet_loss.1} parent=15 // pred_region
        %p175 = scmp.lt.s32.totalorder %s16, 1
        %s176 = scalar_select %p175, %s16, 1
        %p177 = scmp.lt.s32.totalorder %s17, 0
        %s178 = scalar_select %p177, %s17, 0
        %s179 = smul.addr %s176, 8
        %s180 = sadd.s32 %s178, %s179
        %s181 = smul.addr %s180, 8
        %s182 = scalar_lea.vmem %s2, %s181
      $region28: #{mynet_loss.1} parent=15 // pred_fallthru
        _
    $region16: #{mynet_loss.1} parent=5 // pred_fallthru
      _
    %p183 = scmp.le.s32.totalorder 1, %s9
    %p184 = scmp.lt.s32.totalorder %s9, 3
    %p185 = pnand %p183, %p184
    %p186 = pneg %p185
    // Predicated region
    $region29: #{mynet_loss.1} parent=5 // pred_check
      _
    $region30: #{mynet_loss.1} parent=5 // pred_check_branch
      %188 = sbr.rel (%p185) target = $region32
    $region31: #{mynet_loss.1} parent=5 // pred_region
      %s189 = ssub.s32 %s9, 1
      %p190 = scmp.lt.s32.totalorder %s18, 1
      %s191 = scalar_select %p190, %s18, 1
      %p192 = scmp.lt.s32.totalorder %s19, 0
      %s193 = scalar_select %p192, %s19, 0
      %s194 = smul.addr %s191, 10
      %s195 = sadd.s32 %s193, %s194
      %s196 = smul.addr %s195, 8
      %s197 = scalar_lea.vmem %s0, %s196
      %p198 = pneg %p49
      %p199 = pneg %p46
      %p200 = scmp.lt.s32.totalorder %s18, 1
      %s201 = scalar_select %p200, %s18, 1
      %p202 = scmp.lt.s32.totalorder %s19, 0
      %s203 = scalar_select %p202, %s19, 0
      %s204 = smul.addr %s201, 2
      %s205 = sadd.s32 %s203, %s204
      %s206 = smul.addr %s205, 8
      %s207 = scalar_lea.vmem %s1, %s206
      %p208 = pneg %p77
      %p209 = pneg %p74
      %p210 = scmp.lt.s32.totalorder %s18, 1
      %s211 = scalar_select %p210, %s18, 1
      %p212 = scmp.lt.s32.totalorder %s19, 0
      %s213 = scalar_select %p212, %s19, 0
      %s214 = smul.addr %s211, 8
      %s215 = sadd.s32 %s213, %s214
      %s216 = smul.addr %s215, 8
      %s217 = scalar_lea.vmem %s2, %s216
      %p218 = pneg %p105
      %p219 = pneg %p102
      %p220 = pneg %p131
      %p221 = pneg %p128
      %p222 = scmp.lt.s32.totalorder %s18, 1
      %s223 = scalar_select %p222, %s18, 1
      %s224 = smul.addr %s223, 8
      %s225 = scalar_lea.vmem %s3, %s224
      %p226 = scmp.lt.s32.totalorder %s18, 1
      %s227 = scalar_select %p226, %s18, 1
      %p228 = scmp.lt.s32.totalorder %s19, 0
      %s229 = scalar_select %p228, %s19, 0
      %s230 = smul.addr %s227, 10
      %s231 = sadd.s32 %s229, %s230
      %s232 = smul.addr %s231, 8
      %s233 = scalar_lea.vmem %s0, %s232
      %p234 = scmp.lt.s32.totalorder %s18, 1
      %s235 = scalar_select %p234, %s18, 1
      %p236 = scmp.lt.s32.totalorder %s19, 0
      %s237 = scalar_select %p236, %s19, 0
      %s238 = smul.addr %s235, 2
      %s239 = sadd.s32 %s237, %s238
      %s240 = smul.addr %s239, 8
      %s241 = scalar_lea.vmem %s1, %s240
      %p242 = scmp.lt.s32.totalorder %s18, 1
      %s243 = scalar_select %p242, %s18, 1
      %p244 = scmp.lt.s32.totalorder %s19, 0
      %s245 = scalar_select %p244, %s19, 0
      %s246 = smul.addr %s243, 8
      %s247 = sadd.s32 %s245, %s246
      %s248 = smul.addr %s247, 8
      %s249 = scalar_lea.vmem %s2, %s248
      %p250 = scmp.lt.s32.totalorder %s18, 1
      %s251 = scalar_select %p250, %s18, 1
      %s252 = smul.addr %s251, 8
      %s253 = scalar_lea.vmem %s3, %s252
      %p254 = scmp.eq.s32.totalorder %s19, 0
      // Predicated region
      $region33: #{mynet_loss.1} parent=31 // pred_check
        %p255 = pneg %p254
      $region34: #{mynet_loss.1} parent=31 // pred_check_branch
        %257 = sbr.rel (%p255) target = $region36
      $region35: #{mynet_loss.1} parent=31 // pred_region
        %258 = vst [vmem:[%s253] sm:$0xff] 0.0
      $region36: #{mynet_loss.1} parent=31 // pred_fallthru
        _
      %v259 = vld [vmem:[%s249] sm:$0xff]
      %s260 = scalar_lea.vmem %s249, 8
      %v261 = vld [vmem:[%s260] sm:$0xff]
      %s262 = scalar_lea.vmem %s249, 16
      %v263 = vld [vmem:[%s262] sm:$0xff]
      %s264 = scalar_lea.vmem %s249, 24
      %v265 = vld [vmem:[%s264] sm:$0xff]
      %s266 = scalar_lea.vmem %s249, 32
      %v267 = vld [vmem:[%s266] sm:$0xff]
      %s268 = scalar_lea.vmem %s249, 40
      %v269 = vld [vmem:[%s268] sm:$0xff]
      %s270 = scalar_lea.vmem %s249, 48
      %v271 = vld [vmem:[%s270] sm:$0xff]
      %s272 = scalar_lea.vmem %s249, 56
      %v273 = vld [vmem:[%s272] sm:$0xff]
      %v274 = vld [vmem:[%s233] sm:$0xff]
      %s275 = scalar_lea.vmem %s233, 8
      %v276 = vld [vmem:[%s275] sm:$0xff]
      %s277 = scalar_lea.vmem %s233, 16
      %v278 = vld [vmem:[%s277] sm:$0xff]
      %s279 = scalar_lea.vmem %s233, 24
      %v280 = vld [vmem:[%s279] sm:$0xff]
      %v281 = vmul.f32 %v278, 0.5
      %v282 = vsub.f32 %v274, %v281
      %v283 = vmul.f32 %v265, 0.5
      %v284 = vsub.f32 %v261, %v283
      %v285 = vmax.f32 %v282, %v284
      %v286 = vmul.f32 %v280, 0.5
      %v287 = vsub.f32 %v276, %v286
      %v288 = vmul.f32 %v267, 0.5
      %v289 = vsub.f32 %v263, %v288
      %v290 = vmax.f32 %v287, %v289
      %v291 = vadd.f32 %v274, %v281
      %v292 = vadd.f32 %v261, %v283
      %v293 = vmin.f32 %v291, %v292
      %v294 = vadd.f32 %v276, %v286
      %v295 = vadd.f32 %v263, %v288
      %v296 = vmin.f32 %v294, %v295
      %v297 = vsub.f32 %v293, %v285
      %v298 = vmax.f32 %v297, 0.0
      %v299 = vsub.f32 %v296, %v290
      %v300 = vmax.f32 %v299, 0.0
      %v301 = vmul.f32 %v298, %v300
      %v302 = vmul.f32 %v278, %v280
      %v303 = vmul.f32 %v265, %v267
      %v304 = vadd.f32 %v302, %v303
      %v305 = vsub.f32 %v304, %v301
      %v306 = vadd.f32 %v305, 1e-16
      %v307 = vrcp.pop %v306
      %v308 = vmul.f32 %v301, %v307
      %v309 = vmul.f32 %v308, %v308
      %v310 = vsub.f32 1.0, %v309
      %v311 = vmul.f32 %v310, %v259
      %v312 = vld [vmem:[%s241] sm:$0xff]
      %s313 = scalar_lea.vmem %s241, 8
      %v314 = vld [vmem:[%s313] sm:$0xff]
      %v315 = vadd.f32 %v312, %v314
      %vm316 = vcmp.gt.f32.partialorder %v315, 0.0
      %v317 = vsel %vm316, 1, 0
      %v318 = vcvt.s32.f32 %v317
      %v319 = vmul.f32 %v318, %v273
      %s320 = scalar_lea.vmem %s233, 32
      %v321 = vld [vmem:[%s320] sm:$0xff]
      %v322 = vmax.f32 %v321, 0.0
      %v323 = vmul.f32 %v321, %v314
      %v324 = vsub.f32 %v322, %v323
      %v325 = vand.u32 2147483647, %v321
      %v326 = vsub.f32 0.0, %v325
      %v327 = vmul.f32 %v326, 1.442695
      %v328 = vpow.pop %v327
      %v329 = vadd.f32 %v328, 1.0
      %v330 = vlog2.pop %v329
      %v331 = vmul.f32 %v330, 0.6931472
      %v332 = vmul.f32 -0.5, %v328
      %v333 = vadd.f32 %v332, 1.0
      %v334 = vmul.f32 %v333, %v328
      %v335 = vand.u32 2147483647, %v328
      %vm336 = vcmp.lt.f32.partialorder %v335, 0.0004427343
      %v337 = vsel %vm336, %v334, %v331
      %v338 = vadd.f32 %v324, %v337
      %v339 = vmul.f32 %v338, %v319
      %s340 = scalar_lea.vmem %s233, 40
      %v341 = vld [vmem:[%s340] sm:$0xff]
      %v342 = vmax.f32 %v341, 0.0
      %v343 = vmul.f32 %v341, %v269
      %v344 = vsub.f32 %v342, %v343
      %v345 = vand.u32 2147483647, %v341
      %v346 = vsub.f32 0.0, %v345
      %v347 = vmul.f32 %v346, 1.442695
      %v348 = vpow.pop %v347
      %v349 = vadd.f32 %v348, 1.0
      %v350 = vlog2.pop %v349
      %v351 = vmul.f32 %v350, 0.6931472
      %v352 = vmul.f32 -0.5, %v348
      %v353 = vadd.f32 %v352, 1.0
      %v354 = vmul.f32 %v353, %v348
      %v355 = vand.u32 2147483647, %v348
      %vm356 = vcmp.lt.f32.partialorder %v355, 0.0004427343
      %v357 = vsel %vm356, %v354, %v351
      %v358 = vadd.f32 %v344, %v357
      %v359 = vmul.f32 %v358, %v259
      %vm360 = vcmp.eq.f32.partialorder %v271, 0.0
      %v361 = vsel %vm360, 1, 0
      %v362 = vcvt.s32.f32 %v361
      %v363 = vmul.f32 %v259, %v362
      %s364 = scalar_lea.vmem %s233, 48
      %v365 = vld [vmem:[%s364] sm:$0xff]
      %v366 = vmax.f32 %v365, 0.0
      %v367 = vmul.f32 %v365, %v363
      %v368 = vsub.f32 %v366, %v367
      %v369 = vand.u32 2147483647, %v365
      %v370 = vsub.f32 0.0, %v369
      %v371 = vmul.f32 %v370, 1.442695
      %v372 = vpow.pop %v371
      %v373 = vadd.f32 %v372, 1.0
      %v374 = vlog2.pop %v373
      %v375 = vmul.f32 %v374, 0.6931472
      %v376 = vmul.f32 -0.5, %v372
      %v377 = vadd.f32 %v376, 1.0
      %v378 = vmul.f32 %v377, %v372
      %v379 = vand.u32 2147483647, %v372
      %vm380 = vcmp.lt.f32.partialorder %v379, 0.0004427343
      %v381 = vsel %vm380, %v378, %v375
      %v382 = vadd.f32 %v368, %v381
      %v383 = vadd.f32 %v382, 0.0
      %vm384 = vcmp.eq.f32.partialorder %v271, 1.0
      %v385 = vsel %vm384, 1, 0
      %v386 = vcvt.s32.f32 %v385
      %v387 = vmul.f32 %v259, %v386
      %s388 = scalar_lea.vmem %s233, 56
      %v389 = vld [vmem:[%s388] sm:$0xff]
      %v390 = vmax.f32 %v389, 0.0
      %v391 = vmul.f32 %v389, %v387
      %v392 = vsub.f32 %v390, %v391
      %v393 = vand.u32 2147483647, %v389
      %v394 = vsub.f32 0.0, %v393
      %v395 = vmul.f32 %v394, 1.442695
      %v396 = vpow.pop %v395
      %v397 = vadd.f32 %v396, 1.0
      %v398 = vlog2.pop %v397
      %v399 = vmul.f32 %v398, 0.6931472
      %v400 = vmul.f32 -0.5, %v396
      %v401 = vadd.f32 %v400, 1.0
      %v402 = vmul.f32 %v401, %v396
      %v403 = vand.u32 2147483647, %v396
      %vm404 = vcmp.lt.f32.partialorder %v403, 0.0004427343
      %v405 = vsel %vm404, %v402, %v399
      %v406 = vadd.f32 %v392, %v405
      %v407 = vadd.f32 %v383, %v406
      %vm408 = vcmp.eq.f32.partialorder %v271, 2.0
      %v409 = vsel %vm408, 1, 0
      %v410 = vcvt.s32.f32 %v409
      %v411 = vmul.f32 %v259, %v410
      %s412 = scalar_lea.vmem %s233, 64
      %v413 = vld [vmem:[%s412] sm:$0xff]
      %v414 = vmax.f32 %v413, 0.0
      %v415 = vmul.f32 %v413, %v411
      %v416 = vsub.f32 %v414, %v415
      %v417 = vand.u32 2147483647, %v413
      %v418 = vsub.f32 0.0, %v417
      %v419 = vmul.f32 %v418, 1.442695
      %v420 = vpow.pop %v419
      %v421 = vadd.f32 %v420, 1.0
      %v422 = vlog2.pop %v421
      %v423 = vmul.f32 %v422, 0.6931472
      %v424 = vmul.f32 -0.5, %v420
      %v425 = vadd.f32 %v424, 1.0
      %v426 = vmul.f32 %v425, %v420
      %v427 = vand.u32 2147483647, %v420
      %vm428 = vcmp.lt.f32.partialorder %v427, 0.0004427343
      %v429 = vsel %vm428, %v426, %v423
      %v430 = vadd.f32 %v416, %v429
      %v431 = vadd.f32 %v407, %v430
      %vm432 = vcmp.eq.f32.partialorder %v271, 3.0
      %v433 = vsel %vm432, 1, 0
      %v434 = vcvt.s32.f32 %v433
      %v435 = vmul.f32 %v259, %v434
      %s436 = scalar_lea.vmem %s233, 72
      %v437 = vld [vmem:[%s436] sm:$0xff]
      %v438 = vmax.f32 %v437, 0.0
      %v439 = vmul.f32 %v437, %v435
      %v440 = vsub.f32 %v438, %v439
      %v441 = vand.u32 2147483647, %v437
      %v442 = vsub.f32 0.0, %v441
      %v443 = vmul.f32 %v442, 1.442695
      %v444 = vpow.pop %v443
      %v445 = vadd.f32 %v444, 1.0
      %v446 = vlog2.pop %v445
      %v447 = vmul.f32 %v446, 0.6931472
      %v448 = vmul.f32 -0.5, %v444
      %v449 = vadd.f32 %v448, 1.0
      %v450 = vmul.f32 %v449, %v444
      %v451 = vand.u32 2147483647, %v444
      %vm452 = vcmp.lt.f32.partialorder %v451, 0.0004427343
      %v453 = vsel %vm452, %v450, %v447
      %v454 = vadd.f32 %v440, %v453
      %v455 = vadd.f32 %v431, %v454
      %v456 = vmul.f32 %v455, %v273
      %v457 = vld [vmem:[%s253] sm:$0x1]
      %v458 = vrot.slane %v311, 4
      %v459 = vadd.f32 %v311, %v458
      %v460 = vrot.slane %v459, 2
      %v461 = vadd.f32 %v459, %v460
      %v462 = vrot.slane %v461, 1
      %v463 = vadd.f32 %v461, %v462
      %v464 = vadd.f32 %v457, %v463
      %465 = vst [vmem:[%s253] sm:$0x1] %v464
      %v466 = vld [vmem:[%s253 + $0x1] sm:$0x1]
      %v467 = vrot.slane %v339, 4
      %v468 = vadd.f32 %v339, %v467
      %v469 = vrot.slane %v468, 2
      %v470 = vadd.f32 %v468, %v469
      %v471 = vrot.slane %v470, 1
      %v472 = vadd.f32 %v470, %v471
      %v473 = vadd.f32 %v466, %v472
      %474 = vst [vmem:[%s253 + $0x1] sm:$0x1] %v473
      %v475 = vld [vmem:[%s253 + $0x2] sm:$0x1]
      %v476 = vrot.slane %v359, 4
      %v477 = vadd.f32 %v359, %v476
      %v478 = vrot.slane %v477, 2
      %v479 = vadd.f32 %v477, %v478
      %v480 = vrot.slane %v479, 1
      %v481 = vadd.f32 %v479, %v480
      %v482 = vadd.f32 %v475, %v481
      %483 = vst [vmem:[%s253 + $0x2] sm:$0x1] %v482
      %v484 = vld [vmem:[%s253 + $0x3] sm:$0x1]
      %v485 = vrot.slane %v456, 4
      %v486 = vadd.f32 %v456, %v485
      %v487 = vrot.slane %v486, 2
      %v488 = vadd.f32 %v486, %v487
      %v489 = vrot.slane %v488, 1
      %v490 = vadd.f32 %v488, %v489
      %v491 = vadd.f32 %v484, %v490
      %492 = vst [vmem:[%s253 + $0x3] sm:$0x1] %v491
      %v493 = vld [vmem:[%s253 + $0x4] sm:$0x1]
      %v494 = vrot.slane %v319, 4
      %v495 = vadd.f32 %v319, %v494
      %v496 = vrot.slane %v495, 2
      %v497 = vadd.f32 %v495, %v496
      %v498 = vrot.slane %v497, 1
      %v499 = vadd.f32 %v497, %v498
      %v500 = vadd.f32 %v493, %v499
      %501 = vst [vmem:[%s253 + $0x4] sm:$0x1] %v500
      %v502 = vld [vmem:[%s253 + $0x5] sm:$0x1]
      %v503 = vrot.slane %v259, 4
      %v504 = vadd.f32 %v259, %v503
      %v505 = vrot.slane %v504, 2
      %v506 = vadd.f32 %v504, %v505
      %v507 = vrot.slane %v506, 1
      %v508 = vadd.f32 %v506, %v507
      %v509 = vadd.f32 %v502, %v508
      %510 = vst [vmem:[%s253 + $0x5] sm:$0x1] %v509
      %p511 = scmp.lt.s32.totalorder %s18, 1
      %s512 = scalar_select %p511, %s18, 1
      %s513 = smul.addr %s512, 8
      %s514 = scalar_lea.vmem %s3, %s513
      // Predicated region
      $region37: #{mynet_loss.1} parent=31 // pred_check
        %p515 = pneg %p128
      $region38: #{mynet_loss.1} parent=31 // pred_check_branch
        %517 = sbr.rel (%p515) target = $region40
      $region39: #{mynet_loss.1} parent=31 // pred_region
        _
      $region40: #{mynet_loss.1} parent=31 // pred_fallthru
        _
    $region32: #{mynet_loss.1} parent=5 // pred_fallthru
      _
    %p518 = scmp.le.s32.totalorder 2, %s9
    // Predicated region
    $region41: #{mynet_loss.1} parent=5 // pred_check
      %p519 = pneg %p518
    $region42: #{mynet_loss.1} parent=5 // pred_check_branch
      %521 = sbr.rel (%p519) target = $region44
    $region43: #{mynet_loss.1} parent=5 // pred_region
      %s522 = ssub.s32 %s9, 2
      // Predicated region
      $region45: #{mynet_loss.1} parent=43 // pred_check
        %p523 = pneg %p134
      $region46: #{mynet_loss.1} parent=43 // pred_check_branch
        %525 = sbr.rel (%p523) target = $region48
      $region47: #{mynet_loss.1} parent=43 // pred_region
        %p526 = scmp.lt.s32.totalorder %s20, 1
        %s527 = scalar_select %p526, %s20, 1
        %s528 = smul.addr %s527, 8
        %s529 = scalar_lea.vmem %s3, %s528
      $region48: #{mynet_loss.1} parent=43 // pred_fallthru
        _
    $region44: #{mynet_loss.1} parent=5 // pred_fallthru
      _
  $region6: #{mynet_loss.1} parent=0 // loop_footer
    %s13 = sadd.s32 1, %s9
  $region7: #{mynet_loss.1} parent=0 // loop_footer_branch
    %8 = sbr.rel target = $region3
  $region8: #{mynet_loss.1} parent=0 // loop_exit
    _

</llo_original>
